<compile_context>
chip_gen: v5e
topology: v5e:2x2
jax: 0.10.0
libtpu: 0.0.40
codegen_flags: <defaults>
</compile_context>

<pallas_src>
import jax
import jax.numpy as jnp
from jax.experimental import pallas as pl
from jax.experimental.pallas import tpu as pltpu

TAU = 0.04
LRELU_SLOPE = 0.1
HIDDEN = 16
MPD_PERIODS = (2, 4)      # synthetic multi-period discriminator periods
MSD_SCALES = (1, 2)       # synthetic multi-scale discriminator avg-pool factors
MSD_FRAME = 16            # frame (receptive field) width for the MSD heads

CIN_MAX = max(max(MPD_PERIODS), MSD_FRAME)   # padded feature (sublane) dim = 16
NUM_SCALES = len(MPD_PERIODS) + len(MSD_SCALES)
M_TILE_MAX = 4096         # cap; sweep 2048/4096/8192 for long audio


# --------------------------------------------------------------------------
# Pallas kernel 1 (fused heads): flat schedule over valid (scale, tile) pairs.
#   One MXU matmul per step over the concatenated [real | fake] lane tile.
#   Outputs 3 lane-dense rows per tile: diff, masked (dr-1)^2, masked dg^2.
# --------------------------------------------------------------------------
def _fused_disc_kernel(ss_ref, sblk_ref, srem_ref, b2_ref,      # scalar-prefetch (SMEM)
                       x_ref, w1t_ref, b1_ref, w2_ref,          # inputs
                       out_ref):                                # output (3, M_TILE)
    i = pl.program_id(0)
    mt = out_ref.shape[-1]

    # Single MXU op for both branches: (H, CIN) x (CIN, 2*M_TILE), f32 accumulation.
    h = jnp.dot(w1t_ref[...], x_ref[...], preferred_element_type=jnp.float32)
    h = h + b1_ref[...]
    h = jnp.where(h >= 0.0, h, LRELU_SLOPE * h)                  # leaky relu (VPU)
    # HIDDEN -> 1 projection as VPU multiply + sublane-sum (no degenerate N=1 MXU op).
    d = jnp.sum(h * w2_ref[...], axis=0, keepdims=True) + b2_ref[ss_ref[i]]   # (1, 2*mt)

    dr = d[:, :mt]                      # real branch head outputs
    dg = d[:, mt:]                      # fake branch head outputs

    lane = jax.lax.broadcasted_iota(jnp.int32, (1, mt), 1)
    valid = (lane < srem_ref[i]).astype(jnp.float32)             # mask padded columns

    out_ref[...] = jnp.concatenate(
        [dr - dg,
         valid * (dr - 1.0) * (dr - 1.0),
         valid * dg * dg], axis=0)                               # (3, mt) lane-dense store


def run_fused_heads(x_all, w1t, b1, w2, b2, sched, m_tile, total_padded):
    sched_s, sched_blk, sched_rem = sched
    n_steps = int(sched_s.shape[0])

    grid_spec = pltpu.PrefetchScalarGridSpec(
        num_scalar_prefetch=4,
        grid=(n_steps,),
        in_specs=[
            # packed framed audio: (CIN_MAX, 2*total_padded), block = [real|fake] tile
            pl.BlockSpec((CIN_MAX, 2 * m_tile),
                         lambda i, ss, sb, sr, b2r: (0, sb[i])),
            pl.BlockSpec((None, HIDDEN, CIN_MAX),
                         lambda i, ss, sb, sr, b2r: (ss[i], 0, 0)),
            pl.BlockSpec((None, HIDDEN, 1),
                         lambda i, ss, sb, sr, b2r: (ss[i], 0, 0)),
            pl.BlockSpec((None, HIDDEN, 1),
                         lambda i, ss, sb, sr, b2r: (ss[i], 0, 0)),
        ],
        out_specs=pl.BlockSpec((3, m_tile),
                               lambda i, ss, sb, sr, b2r: (0, sb[i])),
    )
    return pl.pallas_call(
        _fused_disc_kernel,
        out_shape=jax.ShapeDtypeStruct((3, total_padded), jnp.float32),
        grid_spec=grid_spec,
        compiler_params=pltpu.CompilerParams(
            # every grid step writes a unique output block -> safe to parallelise;
            # on v7x the two TensorCores split the flat (scale,tile) schedule.
            dimension_semantics=("parallel",),
            vmem_limit_bytes=32 * 1024 * 1024),
    )(sched_s, sched_blk, sched_rem, b2, x_all, w1t, b1, w2)


# --------------------------------------------------------------------------
# Pallas kernel 2: TPRLS masked mean, vectorised over all scales in one pass.
#   `diff < med` is algebraically identical to the torch reference `dr < dg + med`.
# --------------------------------------------------------------------------
def _tprls_kernel(diff_ref, med_ref, cnt_ref, o_ref):
    d = diff_ref[...]                          # (S, m_max) f32
    med = med_ref[...]                         # (S, 1) f32
    cnt = cnt_ref[...]                         # (S, 1) int32
    col = jax.lax.broadcasted_iota(jnp.int32, d.shape, 1)
    mask = jnp.logical_and(d < med, col < cnt)
    maskf = mask.astype(jnp.float32)
    mcnt = jnp.sum(maskf, axis=1, keepdims=True)                              # (S, 1)
    ssum = jnp.sum(jnp.where(mask, (d - med) ** 2, 0.0), axis=1, keepdims=True)
    l_rel = ssum / jnp.maximum(mcnt, 1.0)
    o_ref[...] = jnp.where(mcnt > 0.0, TAU - jnp.maximum(TAU - l_rel, 0.0), 0.0)


def run_tprls(diff_pad, meds, counts):
    s = diff_pad.shape[0]
    vmem = pl.BlockSpec(memory_space=pltpu.MemorySpace.VMEM)
    out = pl.pallas_call(
        _tprls_kernel,
        out_shape=jax.ShapeDtypeStruct((s, 1), jnp.float32),
        in_specs=[vmem, vmem, vmem],
        out_specs=vmem,
    )(diff_pad,
      meds.reshape(s, 1).astype(jnp.float32),
      jnp.asarray(counts, jnp.int32).reshape(s, 1))
    return jnp.sum(out)


# --------------------------------------------------------------------------
# JAX glue: framing, packed layout, schedule, parameter stacking, medians.
# --------------------------------------------------------------------------
def _round_up(x, m):
    return ((x + m - 1) // m) * m


def _frame_mpd(y, period):
    b, t = y.shape
    t_use = (t // period) * period
    fr = y[:, :t_use].reshape(-1, period)        # (B*L, period)
    return fr.T                                   # (Cin=period, M)


def _frame_msd(y, scale):
    b, t = y.shape
    t_use = (t // scale) * scale
    pooled = y[:, :t_use].reshape(b, t_use // scale, scale).mean(axis=-1)
    n_fr = pooled.shape[1] // MSD_FRAME
    fr = pooled[:, : n_fr * MSD_FRAME].reshape(-1, MSD_FRAME)   # (B*L, F)
    return fr.T                                                  # (Cin=F, M)


def _framed_pairs(y, y_hat):
    pairs = []
    for p in MPD_PERIODS:
        pairs.append((_frame_mpd(y, p), _frame_mpd(y_hat, p)))
    for s in MSD_SCALES:
        pairs.append((_frame_msd(y, s), _frame_msd(y_hat, s)))
    return pairs


def _build_plan(counts):
    """Static tiling plan: lane-tile size, per-scale padded lengths, flat schedule."""
    m_tile = max(128, min(M_TILE_MAX, _round_up(max(counts), 128)))
    padded = [_round_up(c, m_tile) for c in counts]
    sched_s, sched_blk, sched_rem = [], [], []
    blk_off = 0
    for s, (c, p) in enumerate(zip(counts, padded)):
        nb = p // m_tile
        for m in range(nb):
            sched_s.append(s)
            sched_blk.append(blk_off + m)           # block index into packed layout
            sched_rem.append(c - m * m_tile)        # valid columns left in this tile
        blk_off += nb
    sched = (jnp.asarray(sched_s, jnp.int32),
             jnp.asarray(sched_blk, jnp.int32),
             jnp.asarray(sched_rem, jnp.int32))
    return m_tile, padded, sched


def _build_x(pairs, padded, m_tile):
    """Packed (CIN_MAX, 2*sum(padded)) bf16 layout; per tile: [real M_TILE | fake M_TILE]."""
    segs = []
    for (xr, xg), p in zip(pairs, padded):
        cin, mm = xr.shape
        pad = lambda a: jnp.pad(a, ((0, CIN_MAX - cin), (0, p - mm)))
        nt = p // m_tile
        both = jnp.stack([pad(xr).reshape(CIN_MAX, nt, m_tile),
                          pad(xg).reshape(CIN_MAX, nt, m_tile)], axis=2)
        segs.append(both.reshape(CIN_MAX, 2 * p))
    return jnp.concatenate(segs, axis=1).astype(jnp.bfloat16)


def _stack_params(params):
    heads = params["mpd"] + params["msd"]
    w1t, b1, w2, b2 = [], [], [], []
    for h in heads:
        cin = h["w1"].shape[0]
        w1t.append(jnp.pad(h["w1"].T, ((0, 0), (0, CIN_MAX - cin))))  # (H, CIN_MAX)
        b1.append(h["b1"].reshape(HIDDEN, 1))
        w2.append(h["w2"].reshape(HIDDEN, 1))
        b2.append(h["b2"].reshape(()))
    return (jnp.stack(w1t).astype(jnp.bfloat16),   # (S, H, CIN_MAX) bf16
            jnp.stack(b1),                          # (S, H, 1) f32
            jnp.stack(w2),                          # (S, H, 1) f32
            jnp.stack(b2))                          # (S,) f32


def init_params(key):
    def head(k, cin):
        k1, k2, k3, k4 = jax.random.split(k, 4)
        return {
            "w1": jax.random.normal(k1, (cin, HIDDEN), jnp.float32) * 0.5,
            "b1": jax.random.normal(k2, (HIDDEN,), jnp.float32) * 0.1,
            "w2": jax.random.normal(k3, (HIDDEN,), jnp.float32) * 0.5,
            "b2": jax.random.normal(k4, (), jnp.float32) * 0.1,
        }
    keys = jax.random.split(key, NUM_SCALES)
    mpd = [head(keys[i], p) for i, p in enumerate(MPD_PERIODS)]
    msd = [head(keys[len(MPD_PERIODS) + i], MSD_FRAME) for i in range(len(MSD_SCALES))]
    return {"mpd": mpd, "msd": msd}


# --------------------------------------------------------------------------
# DiscriminatorLoss.forward:  d_loss = loss_disc_s + loss_disc_f + loss_rel
# --------------------------------------------------------------------------
@jax.jit
def discriminator_loss_forward(params, y, y_hat):
    pairs = _framed_pairs(y, y_hat)
    counts = [int(xr.shape[1]) for xr, _ in pairs]          # static python ints
    m_tile, padded, sched = _build_plan(counts)
    x_all = _build_x(pairs, padded, m_tile)
    w1t, b1, w2, b2 = _stack_params(params)

    out = run_fused_heads(x_all, w1t, b1, w2, b2, sched, m_tile, sum(padded))
    # out rows: 0 = dr - dg, 1 = masked (dr-1)^2, 2 = masked dg^2  (packed per scale)

    # discriminator_loss: sum over scales of mean((dr-1)^2) + mean(dg^2)
    loss_disc = jnp.float32(0.0)
    off = 0
    for c, p in zip(counts, padded):
        loss_disc = loss_disc + (jnp.sum(out[1, off:off + p])
                                 + jnp.sum(out[2, off:off + p])) / c
        off += p

    # Batched torch-style median (lower of the two middle values) over all scales.
    m_max = max(padded)
    rows, off = [], 0
    for p in padded:
        rows.append(jnp.pad(out[0, off:off + p], (0, m_max - p)))
        off += p
    diff_pad = jnp.stack(rows)                               # (S, m_max)
    col = jnp.arange(m_max)[None, :]
    cnt_col = jnp.asarray(counts, jnp.int32)[:, None]
    d_sorted = jnp.sort(jnp.where(col < cnt_col, diff_pad, jnp.inf), axis=1)
    meds = jnp.stack([d_sorted[i, (c - 1) // 2] for i, c in enumerate(counts)])

    loss_rel = run_tprls(diff_pad, meds, counts)
    return loss_disc + loss_rel


# --------------------------------------------------------------------------
# Pure-JAX reference (same bf16 matmul inputs / f32 accumulation) for validation
# --------------------------------------------------------------------------
def _reference_loss(params, y, y_hat):
    heads = params["mpd"] + params["msd"]
    pairs = _framed_pairs(y, y_hat)
    total = jnp.float32(0.0)
    rel = jnp.float32(0.0)
    for (xr, xg), h in zip(pairs, heads):
        w1t = h["w1"].T.astype(jnp.bfloat16)
        b1 = h["b1"].reshape(-1, 1)
        w2 = h["w2"].reshape(-1, 1)

        def run(x):
            hh = jnp.dot(w1t, x.astype(jnp.bfloat16),
                         preferred_element_type=jnp.float32) + b1
            hh = jnp.where(hh >= 0.0, hh, LRELU_SLOPE * hh)
            return jnp.sum(hh * w2, axis=0) + h["b2"]       # (M,)

        dr, dg = run(xr), run(xg)
        total = total + jnp.mean((dr - 1.0) ** 2) + jnp.mean(dg * dg)
        diff = dr - dg
        n = diff.shape[0]
        med = jnp.sort(diff)[(n - 1) // 2]
        mask = diff < med                                    # == dr < dg + med
        cnt = jnp.sum(mask.astype(jnp.float32))
        l_rel = jnp.sum(jnp.where(mask, (diff - med) ** 2, 0.0)) / jnp.maximum(cnt, 1.0)
        rel = rel + jnp.where(cnt > 0.0, TAU - jax.nn.relu(TAU - l_rel), 0.0)
    return total + rel


if __name__ == "__main__":
    key = jax.random.PRNGKey(0)
    ky, kh = jax.random.split(key)
    B, T = 2, 256
    y = jax.random.normal(ky, (B, T), jnp.float32)
    y_hat = jax.random.normal(kh, (B, T), jnp.float32)

    params = init_params(jax.random.PRNGKey(42))

    d_loss = discriminator_loss_forward(params, y, y_hat)
    d_loss = jax.block_until_ready(d_loss)
    assert d_loss.shape == () and bool(jnp.isfinite(d_loss)), d_loss

    ref = jax.block_until_ready(_reference_loss(params, y, y_hat))
    assert bool(jnp.allclose(d_loss, ref, rtol=1e-2, atol=1e-2)), (d_loss, ref)

    print("KERNEL_OK")
</pallas_src>

<mosaic_0001>
module attributes {stable_mosaic.version = 11 : i64} {
  func.func @_fused_disc_kernel(%arg0: i32, %arg1: memref<4xi32, #tpu.memory_space<smem>>, %arg2: memref<4xi32, #tpu.memory_space<smem>>, %arg3: memref<4xi32, #tpu.memory_space<smem>>, %arg4: memref<4xf32, #tpu.memory_space<smem>>, %arg5: memref<16x512xbf16, #tpu.memory_space<vmem>>, %arg6: memref<1x16x16xbf16, #tpu.memory_space<vmem>>, %arg7: memref<1x16x1xf32, #tpu.memory_space<vmem>>, %arg8: memref<1x16x1xf32, #tpu.memory_space<vmem>>, %arg9: memref<3x256xf32, #tpu.memory_space<vmem>>) attributes {dimension_semantics = [#tpu.dimension_semantics<parallel>], iteration_bounds = array<i64: 4>, scalar_prefetch = 4 : i64, scratch_operands = 0 : i64, tpu.core_type = #tpu.core_type<tc>, window_params = [{transform_indices = @transform_0, window_bounds = array<i64: 16, 512>}, {transform_indices = @transform_1, window_bounds = array<i64: 1, 16, 16>}, {transform_indices = @transform_2, window_bounds = array<i64: 1, 16, 1>}, {transform_indices = @transform_3, window_bounds = array<i64: 1, 16, 1>}, {transform_indices = @transform_4, window_bounds = array<i64: 3, 256>}]} {
    %c0 = arith.constant 0 : index
    %c0_0 = arith.constant 0 : index
    %c0_1 = arith.constant 0 : index
    %0 = vector.load %arg6[%c0, %c0_0, %c0_1] : memref<1x16x16xbf16, #tpu.memory_space<vmem>>, vector<1x16x16xbf16>
    %1 = vector.shape_cast %0 : vector<1x16x16xbf16> to vector<16x16xbf16>
    %c0_2 = arith.constant 0 : index
    %c0_3 = arith.constant 0 : index
    %2 = vector.load %arg5[%c0_2, %c0_3] : memref<16x512xbf16, #tpu.memory_space<vmem>>, vector<16x512xbf16>
    %cst = arith.constant dense<0.000000e+00> : vector<16x512xf32>
    %3 = tpu.matmul %1, %2, %cst {dimension_numbers = #tpu.dot_dimension_numbers<[1], [0], [0], [1], [0, 0, 1, 1], [], []>} : vector<16x16xbf16>, vector<16x512xbf16>, vector<16x512xf32> -> vector<16x512xf32>
    %c0_4 = arith.constant 0 : index
    %c0_5 = arith.constant 0 : index
    %c0_6 = arith.constant 0 : index
    %4 = vector.load %arg7[%c0_4, %c0_5, %c0_6] : memref<1x16x1xf32, #tpu.memory_space<vmem>>, vector<1x16x1xf32>
    %5 = vector.shape_cast %4 : vector<1x16x1xf32> to vector<16x1xf32>
    %6 = vector.broadcast %5 : vector<16x1xf32> to vector<16x512xf32>
    %7 = arith.addf %3, %6 : vector<16x512xf32>
    %cst_7 = arith.constant 0.000000e+00 : f32
    %8 = vector.broadcast %cst_7 : f32 to vector<16x512xf32>
    %9 = arith.cmpf oge, %7, %8 : vector<16x512xf32>
    %cst_8 = arith.constant 1.000000e-01 : f32
    %10 = vector.broadcast %cst_8 : f32 to vector<16x512xf32>
    %11 = arith.mulf %10, %7 : vector<16x512xf32>
    %12 = arith.select %9, %7, %11 : vector<16x512xi1>, vector<16x512xf32>
    %c0_9 = arith.constant 0 : index
    %c0_10 = arith.constant 0 : index
    %c0_11 = arith.constant 0 : index
    %13 = vector.load %arg8[%c0_9, %c0_10, %c0_11] : memref<1x16x1xf32, #tpu.memory_space<vmem>>, vector<1x16x1xf32>
    %14 = vector.shape_cast %13 : vector<1x16x1xf32> to vector<16x1xf32>
    %15 = vector.broadcast %14 : vector<16x1xf32> to vector<16x512xf32>
    %16 = arith.mulf %12, %15 : vector<16x512xf32>
    %cst_12 = arith.constant dense<0.000000e+00> : vector<512xf32>
    %17 = vector.multi_reduction <add>, %16, %cst_12 [0] : vector<16x512xf32> to vector<512xf32>
    %18 = vector.shape_cast %17 : vector<512xf32> to vector<1x512xf32>
    %19 = arith.index_cast %arg0 : i32 to index
    %20 = memref.load %arg1[%19] : memref<4xi32, #tpu.memory_space<smem>>
    %21 = arith.index_cast %20 : i32 to index
    %22 = memref.load %arg4[%21] : memref<4xf32, #tpu.memory_space<smem>>
    %23 = vector.broadcast %22 : f32 to vector<1x512xf32>
    %24 = arith.addf %18, %23 : vector<1x512xf32>
    %25 = vector.extract_strided_slice %24 {offsets = [0, 0], sizes = [1, 256], strides = [1, 1]} : vector<1x512xf32> to vector<1x256xf32>
    %26 = vector.extract_strided_slice %24 {offsets = [0, 256], sizes = [1, 256], strides = [1, 1]} : vector<1x512xf32> to vector<1x256xf32>
    %27 = tpu.iota {dimensions = array<i32: 1>} : vector<1x256xi32>
    %28 = arith.index_cast %arg0 : i32 to index
    %29 = memref.load %arg3[%28] : memref<4xi32, #tpu.memory_space<smem>>
    %30 = vector.broadcast %29 : i32 to vector<1x256xi32>
    %31 = arith.cmpi slt, %27, %30 : vector<1x256xi32>
    %32 = arith.extui %31 : vector<1x256xi1> to vector<1x256xi32>
    %33 = arith.sitofp %32 : vector<1x256xi32> to vector<1x256xf32>
    %34 = arith.subf %25, %26 : vector<1x256xf32>
    %cst_13 = arith.constant 1.000000e+00 : f32
    %35 = vector.broadcast %cst_13 : f32 to vector<1x256xf32>
    %36 = arith.subf %25, %35 : vector<1x256xf32>
    %37 = arith.mulf %33, %36 : vector<1x256xf32>
    %cst_14 = arith.constant 1.000000e+00 : f32
    %38 = vector.broadcast %cst_14 : f32 to vector<1x256xf32>
    %39 = arith.subf %25, %38 : vector<1x256xf32>
    %40 = arith.mulf %37, %39 : vector<1x256xf32>
    %41 = arith.mulf %33, %26 : vector<1x256xf32>
    %42 = arith.mulf %41, %26 : vector<1x256xf32>
    %43 = tpu.concatenate %34, %40, %42 in 0 : vector<1x256xf32>, vector<1x256xf32>, vector<1x256xf32> -> vector<3x256xf32>
    %c0_15 = arith.constant 0 : index
    %c0_16 = arith.constant 0 : index
    %44 = vector.load %arg9[%c0_15, %c0_16] : memref<3x256xf32, #tpu.memory_space<vmem>>, vector<3x256xf32>
    tpu.vector_store %arg9[%c0_15, %c0_16], %43 {strides = array<i32>} : memref<3x256xf32, #tpu.memory_space<vmem>>, vector<3x256xf32>,
    return
  }
  func.func @transform_0(%arg0: i32, %arg1: memref<4xi32, #tpu.memory_space<smem>>, %arg2: memref<4xi32, #tpu.memory_space<smem>>, %arg3: memref<4xi32, #tpu.memory_space<smem>>, %arg4: memref<4xf32, #tpu.memory_space<smem>>) -> (i32, i32) {
    %0 = arith.index_cast %arg0 : i32 to index
    %1 = memref.load %arg2[%0] : memref<4xi32, #tpu.memory_space<smem>>
    %c0_i32 = arith.constant 0 : i32
    %c0_i32_0 = arith.constant 0 : i32
    return %c0_i32, %1 : i32, i32
  }
  func.func @transform_1(%arg0: i32, %arg1: memref<4xi32, #tpu.memory_space<smem>>, %arg2: memref<4xi32, #tpu.memory_space<smem>>, %arg3: memref<4xi32, #tpu.memory_space<smem>>, %arg4: memref<4xf32, #tpu.memory_space<smem>>) -> (i32, i32, i32) {
    %0 = arith.index_cast %arg0 : i32 to index
    %1 = memref.load %arg1[%0] : memref<4xi32, #tpu.memory_space<smem>>
    %c0_i32 = arith.constant 0 : i32
    %c0_i32_0 = arith.constant 0 : i32
    %c0_i32_1 = arith.constant 0 : i32
    return %1, %c0_i32, %c0_i32_0 : i32, i32, i32
  }
  func.func @transform_2(%arg0: i32, %arg1: memref<4xi32, #tpu.memory_space<smem>>, %arg2: memref<4xi32, #tpu.memory_space<smem>>, %arg3: memref<4xi32, #tpu.memory_space<smem>>, %arg4: memref<4xf32, #tpu.memory_space<smem>>) -> (i32, i32, i32) {
    %0 = arith.index_cast %arg0 : i32 to index
    %1 = memref.load %arg1[%0] : memref<4xi32, #tpu.memory_space<smem>>
    %c0_i32 = arith.constant 0 : i32
    %c0_i32_0 = arith.constant 0 : i32
    %c0_i32_1 = arith.constant 0 : i32
    return %1, %c0_i32, %c0_i32_0 : i32, i32, i32
  }
  func.func @transform_3(%arg0: i32, %arg1: memref<4xi32, #tpu.memory_space<smem>>, %arg2: memref<4xi32, #tpu.memory_space<smem>>, %arg3: memref<4xi32, #tpu.memory_space<smem>>, %arg4: memref<4xf32, #tpu.memory_space<smem>>) -> (i32, i32, i32) {
    %0 = arith.index_cast %arg0 : i32 to index
    %1 = memref.load %arg1[%0] : memref<4xi32, #tpu.memory_space<smem>>
    %c0_i32 = arith.constant 0 : i32
    %c0_i32_0 = arith.constant 0 : i32
    %c0_i32_1 = arith.constant 0 : i32
    return %1, %c0_i32, %c0_i32_0 : i32, i32, i32
  }
  func.func @transform_4(%arg0: i32, %arg1: memref<4xi32, #tpu.memory_space<smem>>, %arg2: memref<4xi32, #tpu.memory_space<smem>>, %arg3: memref<4xi32, #tpu.memory_space<smem>>, %arg4: memref<4xf32, #tpu.memory_space<smem>>) -> (i32, i32) {
    %0 = arith.index_cast %arg0 : i32 to index
    %1 = memref.load %arg2[%0] : memref<4xi32, #tpu.memory_space<smem>>
    %c0_i32 = arith.constant 0 : i32
    %c0_i32_0 = arith.constant 0 : i32
    return %c0_i32, %1 : i32, i32
  }
}

module attributes {stable_mosaic.version = 11 : i64} {
  func.func @_tprls_kernel(%arg0: memref<4x256xf32, #tpu.memory_space<vmem>>, %arg1: memref<4x1xf32, #tpu.memory_space<vmem>>, %arg2: memref<4x1xi32, #tpu.memory_space<vmem>>, %arg3: memref<4x1xf32, #tpu.memory_space<vmem>>) attributes {dimension_semantics = [], scalar_prefetch = 0 : i64, scratch_operands = 0 : i64, tpu.core_type = #tpu.core_type<tc>} {
    %c0 = arith.constant 0 : index
    %c0_0 = arith.constant 0 : index
    %0 = vector.load %arg0[%c0, %c0_0] : memref<4x256xf32, #tpu.memory_space<vmem>>, vector<4x256xf32>
    %c0_1 = arith.constant 0 : index
    %c0_2 = arith.constant 0 : index
    %1 = vector.load %arg1[%c0_1, %c0_2] : memref<4x1xf32, #tpu.memory_space<vmem>>, vector<4x1xf32>
    %c0_3 = arith.constant 0 : index
    %c0_4 = arith.constant 0 : index
    %2 = vector.load %arg2[%c0_3, %c0_4] : memref<4x1xi32, #tpu.memory_space<vmem>>, vector<4x1xi32>
    %3 = tpu.iota {dimensions = array<i32: 1>} : vector<4x256xi32>
    %4 = vector.broadcast %1 : vector<4x1xf32> to vector<4x256xf32>
    %5 = arith.cmpf olt, %0, %4 : vector<4x256xf32>
    %6 = vector.broadcast %2 : vector<4x1xi32> to vector<4x256xi32>
    %7 = arith.cmpi slt, %3, %6 : vector<4x256xi32>
    %8 = arith.andi %5, %7 : vector<4x256xi1>
    %9 = arith.extui %8 : vector<4x256xi1> to vector<4x256xi32>
    %10 = arith.sitofp %9 : vector<4x256xi32> to vector<4x256xf32>
    %cst = arith.constant dense<0.000000e+00> : vector<4xf32>
    %11 = vector.multi_reduction <add>, %10, %cst [1] : vector<4x256xf32> to vector<4xf32>
    %12 = vector.shape_cast %11 : vector<4xf32> to vector<4x1xf32>
    %13 = vector.broadcast %1 : vector<4x1xf32> to vector<4x256xf32>
    %14 = arith.subf %0, %13 : vector<4x256xf32>
    %15 = arith.mulf %14, %14 : vector<4x256xf32>
    %cst_5 = arith.constant 0.000000e+00 : f32
    %16 = vector.broadcast %cst_5 : f32 to vector<4x256xf32>
    %17 = arith.select %8, %15, %16 : vector<4x256xi1>, vector<4x256xf32>
    %cst_6 = arith.constant dense<0.000000e+00> : vector<4xf32>
    %18 = vector.multi_reduction <add>, %17, %cst_6 [1] : vector<4x256xf32> to vector<4xf32>
    %19 = vector.shape_cast %18 : vector<4xf32> to vector<4x1xf32>
    %cst_7 = arith.constant 1.000000e+00 : f32
    %20 = vector.broadcast %cst_7 : f32 to vector<4x1xf32>
    %21 = arith.maximumf %12, %20 : vector<4x1xf32>
    %22 = arith.divf %19, %21 : vector<4x1xf32>
    %cst_8 = arith.constant 0.000000e+00 : f32
    %23 = vector.broadcast %cst_8 : f32 to vector<4x1xf32>
    %24 = arith.cmpf ogt, %12, %23 : vector<4x1xf32>
    %cst_9 = arith.constant 4.000000e-02 : f32
    %25 = vector.broadcast %cst_9 : f32 to vector<4x1xf32>
    %26 = arith.subf %25, %22 : vector<4x1xf32>
    %cst_10 = arith.constant 0.000000e+00 : f32
    %27 = vector.broadcast %cst_10 : f32 to vector<4x1xf32>
    %28 = arith.maximumf %26, %27 : vector<4x1xf32>
    %cst_11 = arith.constant 4.000000e-02 : f32
    %29 = vector.broadcast %cst_11 : f32 to vector<4x1xf32>
    %30 = arith.subf %29, %28 : vector<4x1xf32>
    %cst_12 = arith.constant 0.000000e+00 : f32
    %31 = vector.broadcast %cst_12 : f32 to vector<4x1xf32>
    %32 = arith.select %24, %30, %31 : vector<4x1xi1>, vector<4x1xf32>
    %c0_13 = arith.constant 0 : index
    %c0_14 = arith.constant 0 : index
    %33 = vector.load %arg3[%c0_13, %c0_14] : memref<4x1xf32, #tpu.memory_space<vmem>>, vector<4x1xf32>
    tpu.vector_store %arg3[%c0_13, %c0_14], %32 {strides = array<i32>} : memref<4x1xf32, #tpu.memory_space<vmem>>, vector<4x1xf32>,
    return
  }
}

</mosaic_0001>

<llo_original>
// kernel: discriminator_loss_forward.3
$region0: #{discriminator_loss_forward.3}
  #allocation0 [shape = 'u32[]', space=smem, size = 0x4, offset = 0x4, fixed_abs, tag = 'smem constant byte address 0x4 - core index']
  #allocation1 [shape = 'u32[72,128]{1,0:T(1,128)}', space=vmem, size = 0x9000, scoped, tag = 'internal scratch']
  %s0 = inlined_call_operand.vmem [shape: f32[4,256], index: 0, kind: input, shape index: {}]
  %s1 = inlined_call_operand.vmem [shape: f32[4,1], index: 1, kind: input, shape index: {}]
  %s2 = inlined_call_operand.vmem [shape: s32[4,1], index: 2, kind: input, shape index: {}]
  %s3 = inlined_call_operand.vmem [shape: f32[4,1], index: 3, kind: output, shape index: {}]
  %s4 = sld [smem:[#allocation0]]
  $region22: #{discriminator_loss_forward.3} parent=0
    _
  %s6 = ssub.s32 1, %s4
  %s7 = scalar_select 0, %s6, %s4
  // Predicated region
  $region2: #{discriminator_loss_forward.3} parent=0 // pred_check
    _
  $region3: #{discriminator_loss_forward.3} parent=0 // pred_check_branch
    %9 = sbr.rel (0) target = $region5
  $region4: #{discriminator_loss_forward.3} parent=0 // pred_region
    _
  $region5: #{discriminator_loss_forward.3} parent=0 // pred_fallthru
    _
  // Predicated region
  $region6: #{discriminator_loss_forward.3} parent=0 // pred_check
    _
  $region7: #{discriminator_loss_forward.3} parent=0 // pred_check_branch
    %11 = sbr.rel (0) target = $region9
  $region8: #{discriminator_loss_forward.3} parent=0 // pred_region
    _
  $region9: #{discriminator_loss_forward.3} parent=0 // pred_fallthru
    _
  // Predicated region
  $region10: #{discriminator_loss_forward.3} parent=0 // pred_check
    _
  $region11: #{discriminator_loss_forward.3} parent=0 // pred_check_branch
    %13 = sbr.rel (0) target = $region13
  $region12: #{discriminator_loss_forward.3} parent=0 // pred_region
    _
  $region13: #{discriminator_loss_forward.3} parent=0 // pred_fallthru
    _
  %v14 = vld [vmem:[%s0] sm:$0xff]
  %v15 = vld [vmem:[%s1] sm:$0xf]
  %v16 = vld [vmem:[%s2] sm:$0xf]
  %v17 = vlaneseq
  %v18 = vand.u32 %v17, 127
  %v19 = vadd.s32 %v18, 128
  %21 = vset.pattern.permute.xlu0 0
  %22 = vperm.xlu0 %21, %v15
  %v23 = vpop.permute.xlu0 %22
  %v25 = vunpack.c.l.s4 839922192
  %v26 = vunpack.c.0.s8 %v25
  %v27 = vperm.slane %v23, %v26
  %vm29 = vcmp.lt.f32.partialorder %v14, %v27
  %30 = vset.pattern.permute.xlu0 0
  %31 = vperm.xlu0 %30, %v16
  %v32 = vpop.permute.xlu0 %31
  %vm33 = vcmp.lt.s32.totalorder %v18, %v32
  %vm34 = vcmp.lt.s32.totalorder %v19, %v32
  %v35 = vsel %vm33, 1, 0
  %v36 = vsel %vm34, 1, 0
  %v37 = vrot.slane %v36, 4
  %vm38 = vcmask 1043456
  %v39 = vsel %vm38, %v35, %v37
  %vm40 = vcmp.ne.s32.totalorder %v39, 0
  %vm41 = vmand %vm29, %vm40
  %v42 = vsel %vm41, 1, 0
  %v43 = vcvt.s32.f32 %v42
  %45 = vst [vmem:[#allocation1] ss:$2 sm:$0xff] %v43
  %v46 = vld.sshfl [vmem:[#allocation1] sm:$0xff pattern:$0x75316420]
  %v47 = vld.sshfl [vmem:[#allocation1 + $0x8] sm:$0xff pattern:$0x75316420]
  %v50 = vsel %vm38, %v46, 0.0
  %v51 = vsel %vm38, %v47, 0.0
  %v52 = vadd.f32 %v50, %v51
  %53 = vadd.xlane.f32.xlu0 %v52
  %v54 = vpop.xlane.xlu0 %53
  %v55 = vsub.f32 %v14, %v27
  %v56 = vmul.f32 %v55, %v55
  %v57 = vsel %vm41, %v56, 0.0
  %59 = vst [vmem:[#allocation1] ss:$2 sm:$0xff] %v57
  %v60 = vld.sshfl [vmem:[#allocation1] sm:$0xff pattern:$0x75316420]
  %v61 = vld.sshfl [vmem:[#allocation1 + $0x8] sm:$0xff pattern:$0x75316420]
  %v64 = vsel %vm38, %v60, 0.0
  %v65 = vsel %vm38, %v61, 0.0
  %v66 = vadd.f32 %v64, %v65
  %67 = vadd.xlane.f32.xlu0 %v66
  %v68 = vpop.xlane.xlu0 %67
  %v69 = vmax.f32 %v54, 1.0
  %v70 = vrcp.pop %v69
  %v71 = vmul.f32 %v69, %v70
  %v72 = vsub.f32 1.0, %v71
  %v73 = vmul.f32 %v70, %v72
  %v74 = vadd.f32 %v70, %v73
  %vm75 = vweird.f32 %v69
  %vm76 = vweird.f32 %v70
  %vm77 = vmor %vm75, %vm76
  %v78 = vsel %vm77, %v70, %v74
  %v79 = vand.u32 2147483647, %v69
  %vm80 = vcmp.eq.f32.partialorder %v79, 8.507059e+37
  %v81 = vand.u32 %v69, 2147483648
  %v82 = vor.u32 1.1754944e-38, %v81
  %v83 = vsel %vm80, %v82, %v78
  %v84 = vmul.f32 %v68, %v83
  %vm85 = vcmp.gt.f32.partialorder %v54, 0.0
  %v86 = vsub.f32 0.04, %v84
  %v87 = vmax.f32 %v86, 0.0
  %v88 = vsub.f32 0.04, %v87
  %v89 = vsel %vm85, %v88, 0.0
  %vm90 = vcmask 3072
  %91 = vst.msk [vmem:[%s3] sm:$0xf] %vm90, %v89
  // Predicated region
  $region14: #{discriminator_loss_forward.3} parent=0 // pred_check
    _
  $region15: #{discriminator_loss_forward.3} parent=0 // pred_check_branch
    %93 = sbr.rel (0) target = $region17
  $region16: #{discriminator_loss_forward.3} parent=0 // pred_region
    _
  $region17: #{discriminator_loss_forward.3} parent=0 // pred_fallthru
    _
  // Predicated region
  $region18: #{discriminator_loss_forward.3} parent=0 // pred_check
    _
  $region19: #{discriminator_loss_forward.3} parent=0 // pred_check_branch
    %95 = sbr.rel (0) target = $region21
  $region20: #{discriminator_loss_forward.3} parent=0 // pred_region
    _
  $region21: #{discriminator_loss_forward.3} parent=0 // pred_fallthru
    _

// kernel: discriminator_loss_forward.2
$region0: #{discriminator_loss_forward.2}
  #allocation0 [shape = 'u32[]', space=smem, size = 0x4, offset = 0x4, fixed_abs, tag = 'smem constant byte address 0x4 - core index']
  #allocation1 [shape = 'u32[72,128]{1,0:T(1,128)}', space=vmem, size = 0x9000, scoped, tag = 'internal scratch']
  #allocation2 [shape = 's32[1]{0}', space=sflag, size = 0x4, scoped, tag = 'scoped memory for discriminator_loss_forward.2']
  #allocation3 [shape = 'u8[512]{0}', space=smem, size = 0x200, scoped, tag = 'prefetched SMEM operand 0']
  #allocation4 [shape = 'u8[512]{0}', space=smem, size = 0x200, scoped, tag = 'prefetched SMEM operand 1']
  #allocation5 [shape = 'u8[512]{0}', space=smem, size = 0x200, scoped, tag = 'prefetched SMEM operand 2']
  #allocation6 [shape = 'u8[512]{0}', space=smem, size = 0x200, scoped, tag = 'prefetched SMEM operand 3']
  %s0 = inlined_call_operand.vmem [shape: s32[4], index: 0, kind: input, shape index: {}, may-alias: {0,1}]
  %s1 = inlined_call_operand.vmem [shape: s32[4], index: 1, kind: input, shape index: {}, may-alias: {0,1}]
  %s2 = inlined_call_operand.vmem [shape: s32[4], index: 2, kind: input, shape index: {}]
  %s3 = inlined_call_operand.vmem [shape: f32[4], index: 3, kind: input, shape index: {}]
  %s4 = inlined_call_operand.vmem [shape: bf16[16,2048], index: 4, kind: input, shape index: {}]
  %s5 = inlined_call_operand.vmem [shape: bf16[4,16,16], index: 5, kind: input, shape index: {}]
  %s6 = inlined_call_operand.vmem [shape: f32[4,16,1], index: 6, kind: input, shape index: {}]
  %s7 = inlined_call_operand.vmem [shape: f32[4,16,1], index: 7, kind: input, shape index: {}]
  %s8 = inlined_call_operand.vmem [shape: f32[3,1024], index: 8, kind: output, shape index: {}]
  %s9 = sld [smem:[#allocation0]]
  $region72: #{discriminator_loss_forward.2} parent=0
    _
  %s11 = ssub.s32 1, %s9
  %s12 = scalar_select 0, %s11, %s9
  %s14 = sshll.u32 %s0, 4
  %s15 = int_to_ptr.vmem [resolvable:$true] %s14
  %17 = dma.vmem_to_smem %s15, 16, [#allocation3], [#allocation2]
  %s19 = sshll.u32 %s1, 4
  %s20 = int_to_ptr.vmem [resolvable:$true] %s19
  %22 = dma.vmem_to_smem %s20, 16, [#allocation4], [#allocation2]
  %s24 = sshll.u32 %s2, 4
  %s25 = int_to_ptr.vmem [resolvable:$true] %s24
  %27 = dma.vmem_to_smem %s25, 16, [#allocation5], [#allocation2]
  %s29 = sshll.u32 %s3, 4
  %s30 = int_to_ptr.vmem [resolvable:$true] %s29
  %32 = dma.vmem_to_smem %s30, 16, [#allocation6], [#allocation2]
  %34 = dma.done [#allocation2], 64
  %35 = sfence
  $region1: #{discriminator_loss_forward.2} parent=0
    #allocation7 [shape = 'u8[32768]{0}', space=vmem, size = 0x8000, scoped, tag = 'input window, operand 4']
    loop: start=0, step=1, limit=6
    $region2: #{discriminator_loss_forward.2} parent=1 // loop_pre_header
      _
    $region3: #{discriminator_loss_forward.2} parent=1 // loop_header
      %s37 = sphi 0, %s41
      %p38 = scmp.ge.s32.totalorder %s37, 6
      %s49 = sphi 0, %s51
      %s52 = sphi 0, %s49
      %s53 = sphi 0, %s52
      %s69 = sphi 0, %s53
      %s77 = sphi 0, %s79
      %s80 = sphi 0, %s77
      %s81 = sphi 0, %s80
      %s97 = sphi 0, %s81
      %s105 = sphi 0, %s107
      %s108 = sphi 0, %s105
      %s109 = sphi 0, %s108
      %s125 = sphi 0, %s109
      %s133 = sphi 0, %s135
      %s136 = sphi 0, %s133
      %s137 = sphi 0, %s136
      %s153 = sphi 0, %s137
      %s161 = sphi 0, %s163
      %s164 = sphi 0, %s161
      %s165 = sphi 0, %s164
      %s181 = sphi 0, %s165
    $region4: #{discriminator_loss_forward.2} parent=1 // loop_header_branch
      %40 = sbr.rel (%p38) target = $region8
    $region5: #{discriminator_loss_forward.2} parent=1 // loop_body
      %s42 = ssub.s32 %s37, 1
      %s43 = ssub.s32 %s37, 2
      %s44 = sadd.s32 %s37, 1
      %s45 = sld [smem:[#allocation4 + %s37]]
      %s46 = sld [smem:[#allocation4 + %s44]]
      %s47 = ssub.s32 %s45, %s46
      %p48 = scmp.eq.s32.totalorder %s47, 0
      %s50 = sadd.s32 %s49, 1
      %s51 = scalar_select %p48, %s49, %s50
      %p54 = pneg %p48
      %p55 = scmp.eq.s32.totalorder %s37, 3
      %p56 = por %p54, %p55
      %p57 = scmp.ne.s32.totalorder %s49, %s52
      %p58 = scmp.eq.s32.totalorder %s37, 0
      %p59 = por %p57, %p58
      %p60 = scmp.ne.s32.totalorder %s49, %s52
      %p61 = scmp.eq.s32.totalorder %s42, 3
      %p62 = por %p60, %p61
      %p63 = scmp.ne.s32.totalorder %s52, %s53
      %p64 = scmp.eq.s32.totalorder %s42, 0
      %p65 = por %p63, %p64
      %p66 = scmp.ne.s32.totalorder %s52, %s53
      %p67 = scmp.eq.s32.totalorder %s43, 3
      %p68 = por %p66, %p67
      %p70 = scmp.ne.s32.totalorder %s53, %s69
      %p71 = scmp.eq.s32.totalorder %s43, 0
      %p72 = por %p70, %p71
      %s73 = sld [smem:[#allocation3 + %s37]]
      %s74 = sld [smem:[#allocation3 + %s44]]
      %s75 = ssub.s32 %s73, %s74
      %p76 = scmp.eq.s32.totalorder %s75, 0
      %s78 = sadd.s32 %s77, 1
      %s79 = scalar_select %p76, %s77, %s78
      %p82 = pneg %p76
      %p83 = scmp.eq.s32.totalorder %s37, 3
      %p84 = por %p82, %p83
      %p85 = scmp.ne.s32.totalorder %s77, %s80
      %p86 = scmp.eq.s32.totalorder %s37, 0
      %p87 = por %p85, %p86
      %p88 = scmp.ne.s32.totalorder %s77, %s80
      %p89 = scmp.eq.s32.totalorder %s42, 3
      %p90 = por %p88, %p89
      %p91 = scmp.ne.s32.totalorder %s80, %s81
      %p92 = scmp.eq.s32.totalorder %s42, 0
      %p93 = por %p91, %p92
      %p94 = scmp.ne.s32.totalorder %s80, %s81
      %p95 = scmp.eq.s32.totalorder %s43, 3
      %p96 = por %p94, %p95
      %p98 = scmp.ne.s32.totalorder %s81, %s97
      %p99 = scmp.eq.s32.totalorder %s43, 0
      %p100 = por %p98, %p99
      %s101 = sld [smem:[#allocation3 + %s37]]
      %s102 = sld [smem:[#allocation3 + %s44]]
      %s103 = ssub.s32 %s101, %s102
      %p104 = scmp.eq.s32.totalorder %s103, 0
      %s106 = sadd.s32 %s105, 1
      %s107 = scalar_select %p104, %s105, %s106
      %p110 = pneg %p104
      %p111 = scmp.eq.s32.totalorder %s37, 3
      %p112 = por %p110, %p111
      %p113 = scmp.ne.s32.totalorder %s105, %s108
      %p114 = scmp.eq.s32.totalorder %s37, 0
      %p115 = por %p113, %p114
      %p116 = scmp.ne.s32.totalorder %s105, %s108
      %p117 = scmp.eq.s32.totalorder %s42, 3
      %p118 = por %p116, %p117
      %p119 = scmp.ne.s32.totalorder %s108, %s109
      %p120 = scmp.eq.s32.totalorder %s42, 0
      %p121 = por %p119, %p120
      %p122 = scmp.ne.s32.totalorder %s108, %s109
      %p123 = scmp.eq.s32.totalorder %s43, 3
      %p124 = por %p122, %p123
      %p126 = scmp.ne.s32.totalorder %s109, %s125
      %p127 = scmp.eq.s32.totalorder %s43, 0
      %p128 = por %p126, %p127
      %s129 = sld [smem:[#allocation3 + %s37]]
      %s130 = sld [smem:[#allocation3 + %s44]]
      %s131 = ssub.s32 %s129, %s130
      %p132 = scmp.eq.s32.totalorder %s131, 0
      %s134 = sadd.s32 %s133, 1
      %s135 = scalar_select %p132, %s133, %s134
      %p138 = pneg %p132
      %p139 = scmp.eq.s32.totalorder %s37, 3
      %p140 = por %p138, %p139
      %p141 = scmp.ne.s32.totalorder %s133, %s136
      %p142 = scmp.eq.s32.totalorder %s37, 0
      %p143 = por %p141, %p142
      %p144 = scmp.ne.s32.totalorder %s133, %s136
      %p145 = scmp.eq.s32.totalorder %s42, 3
      %p146 = por %p144, %p145
      %p147 = scmp.ne.s32.totalorder %s136, %s137
      %p148 = scmp.eq.s32.totalorder %s42, 0
      %p149 = por %p147, %p148
      %p150 = scmp.ne.s32.totalorder %s136, %s137
      %p151 = scmp.eq.s32.totalorder %s43, 3
      %p152 = por %p150, %p151
      %p154 = scmp.ne.s32.totalorder %s137, %s153
      %p155 = scmp.eq.s32.totalorder %s43, 0
      %p156 = por %p154, %p155
      %s157 = sld [smem:[#allocation4 + %s37]]
      %s158 = sld [smem:[#allocation4 + %s44]]
      %s159 = ssub.s32 %s157, %s158
      %p160 = scmp.eq.s32.totalorder %s159, 0
      %s162 = sadd.s32 %s161, 1
      %s163 = scalar_select %p160, %s161, %s162
      %p166 = pneg %p160
      %p167 = scmp.eq.s32.totalorder %s37, 3
      %p168 = por %p166, %p167
      %p169 = scmp.ne.s32.totalorder %s161, %s164
      %p170 = scmp.eq.s32.totalorder %s37, 0
      %p171 = por %p169, %p170
      %p172 = scmp.ne.s32.totalorder %s161, %s164
      %p173 = scmp.eq.s32.totalorder %s42, 3
      %p174 = por %p172, %p173
      %p175 = scmp.ne.s32.totalorder %s164, %s165
      %p176 = scmp.eq.s32.totalorder %s42, 0
      %p177 = por %p175, %p176
      %p178 = scmp.ne.s32.totalorder %s164, %s165
      %p179 = scmp.eq.s32.totalorder %s43, 3
      %p180 = por %p178, %p179
      %p182 = scmp.ne.s32.totalorder %s165, %s181
      %p183 = scmp.eq.s32.totalorder %s43, 0
      %p184 = por %p182, %p183
      %p185 = scmp.le.s32.totalorder 1, %s37
      %p186 = scmp.lt.s32.totalorder %s37, 5
      %p187 = pnand %p185, %p186
      %p188 = pneg %p187
      // Predicated region
      $region9: #{discriminator_loss_forward.2} parent=5 // pred_check
        _
      $region10: #{discriminator_loss_forward.2} parent=5 // pred_check_branch
        %190 = sbr.rel (%p187) target = $region12
      $region11: #{discriminator_loss_forward.2} parent=5 // pred_region
        %s191 = ssub.s32 %s37, 1
      $region12: #{discriminator_loss_forward.2} parent=5 // pred_fallthru
        _
      %p192 = scmp.lt.s32.totalorder %s37, 4
      // Predicated region
      $region13: #{discriminator_loss_forward.2} parent=5 // pred_check
        %p193 = pneg %p192
      $region14: #{discriminator_loss_forward.2} parent=5 // pred_check_branch
        %195 = sbr.rel (%p193) target = $region16
      $region15: #{discriminator_loss_forward.2} parent=5 // pred_region
        // Predicated region
        $region17: #{discriminator_loss_forward.2} parent=15 // pred_check
          %p196 = pneg %p59
        $region18: #{discriminator_loss_forward.2} parent=15 // pred_check_branch
          %198 = sbr.rel (%p196) target = $region20
        $region19: #{discriminator_loss_forward.2} parent=15 // pred_region
          %s199 = sand.u32 %s49, 1
          %s200 = sand.u32 %s49, 1
          %s201 = smul.addr %s200, 32
          %s202 = scalar_lea.vmem [#allocation7], %s201
          %s203 = sld [smem:[#allocation4 + %s37]]
          %s204 = smul.u32 4, %s203
          %s205 = smul.addr %s204, 4
          %s206 = scalar_lea.vmem %s4, %s205
          // Predicated region
          $region21: #{discriminator_loss_forward.2} parent=19 // pred_check
            _
          $region22: #{discriminator_loss_forward.2} parent=19 // pred_check_branch
            %208 = sbr.rel (0) target = $region24
          $region23: #{discriminator_loss_forward.2} parent=19 // pred_region
            // Predicated region
            $region25: #{discriminator_loss_forward.2} parent=23 // pred_check
              _
            $region26: #{discriminator_loss_forward.2} parent=23 // pred_check_branch
              %210 = sbr.rel (0) target = $region28
            $region27: #{discriminator_loss_forward.2} parent=23 // pred_region
              loop: start=0, step=1, limit=1
              $region29: #{discriminator_loss_forward.2} parent=27 // loop_pre_header
                _
              $region30: #{discriminator_loss_forward.2} parent=27 // loop_header
                %s212 = sphi 0, %s216
                %p213 = scmp.ge.s32.totalorder %s212, 1
                %s217 = sphi %s206, %s206
                %s218 = sphi %s202, %s202
              $region31: #{discriminator_loss_forward.2} parent=27 // loop_header_branch
                %215 = sbr.rel (%p213) target = $region35
              $region32: #{discriminator_loss_forward.2} parent=27 // loop_body
                %v219 = vld [vmem:[%s217] sm:$0xff]
                %220 = vst [vmem:[%s218] sm:$0xff] %v219
                %v221 = vld [vmem:[%s217 + $0x8] sm:$0xff]
                %222 = vst [vmem:[%s218 + $0x8] sm:$0xff] %v221
                %v223 = vld [vmem:[%s217 + $0x40] sm:$0xff]
                %224 = vst [vmem:[%s218 + $0x10] sm:$0xff] %v223
                %v225 = vld [vmem:[%s217 + $0x48] sm:$0xff]
                %226 = vst [vmem:[%s218 + $0x18] sm:$0xff] %v225
              $region33: #{discriminator_loss_forward.2} parent=27 // loop_footer
                %s216 = sadd.s32 1, %s212
              $region34: #{discriminator_loss_forward.2} parent=27 // loop_footer_branch
                %211 = sbr.rel target = $region30
              $region35: #{discriminator_loss_forward.2} parent=27 // loop_exit
                _
            $region28: #{discriminator_loss_forward.2} parent=23 // pred_fallthru
              _
            // Predicated region
            $region36: #{discriminator_loss_forward.2} parent=23 // pred_check
              _
            $region37: #{discriminator_loss_forward.2} parent=23 // pred_check_branch
              %228 = sbr.rel target = $region39
            $region38: #{discriminator_loss_forward.2} parent=23 // pred_region
              _
            $region39: #{discriminator_loss_forward.2} parent=23 // pred_fallthru
              _
          $region24: #{discriminator_loss_forward.2} parent=19 // pred_fallthru
            _
          %229 = vnop
        $region20: #{discriminator_loss_forward.2} parent=15 // pred_fallthru
          _
        // Predicated region
        $region40: #{discriminator_loss_forward.2} parent=15 // pred_check
          %p230 = pneg %p87
        $region41: #{discriminator_loss_forward.2} parent=15 // pred_check_branch
          %232 = sbr.rel (%p230) target = $region43
        $region42: #{discriminator_loss_forward.2} parent=15 // pred_region
          %s233 = sld [smem:[#allocation3 + %s37]]
          %p234 = scmp.lt.s32.totalorder %s233, 3
          %s235 = scalar_select %p234, %s233, 3
          %s236 = smul.addr %s235, 2
          %s237 = smul.addr %s236, 4
          %s238 = scalar_lea.vmem %s5, %s237
          %s239 = sld [smem:[#allocation3 + %s37]]
        $region43: #{discriminator_loss_forward.2} parent=15 // pred_fallthru
          _
        // Predicated region
        $region44: #{discriminator_loss_forward.2} parent=15 // pred_check
          %p240 = pneg %p115
        $region45: #{discriminator_loss_forward.2} parent=15 // pred_check_branch
          %242 = sbr.rel (%p240) target = $region47
        $region46: #{discriminator_loss_forward.2} parent=15 // pred_region
          %s243 = sld [smem:[#allocation3 + %s37]]
          %p244 = scmp.lt.s32.totalorder %s243, 3
          %s245 = scalar_select %p244, %s243, 3
          %s246 = smul.addr %s245, 2
          %s247 = smul.addr %s246, 8
          %s248 = scalar_lea.vmem %s6, %s247
          %s249 = sld [smem:[#allocation3 + %s37]]
        $region47: #{discriminator_loss_forward.2} parent=15 // pred_fallthru
          _
        // Predicated region
        $region48: #{discriminator_loss_forward.2} parent=15 // pred_check
          %p250 = pneg %p143
        $region49: #{discriminator_loss_forward.2} parent=15 // pred_check_branch
          %252 = sbr.rel (%p250) target = $region51
        $region50: #{discriminator_loss_forward.2} parent=15 // pred_region
          %s253 = sld [smem:[#allocation3 + %s37]]
          %p254 = scmp.lt.s32.totalorder %s253, 3
          %s255 = scalar_select %p254, %s253, 3
          %s256 = smul.addr %s255, 2
          %s257 = smul.addr %s256, 8
          %s258 = scalar_lea.vmem %s7, %s257
          %s259 = sld [smem:[#allocation3 + %s37]]
        $region51: #{discriminator_loss_forward.2} parent=15 // pred_fallthru
          _
      $region16: #{discriminator_loss_forward.2} parent=5 // pred_fallthru
        _
      %p260 = scmp.le.s32.totalorder 1, %s37
      %p261 = scmp.lt.s32.totalorder %s37, 5
      %p262 = pnand %p260, %p261
      %p263 = pneg %p262
      // Predicated region
      $region52: #{discriminator_loss_forward.2} parent=5 // pred_check
        _
      $region53: #{discriminator_loss_forward.2} parent=5 // pred_check_branch
        %265 = sbr.rel (%p262) target = $region55
      $region54: #{discriminator_loss_forward.2} parent=5 // pred_region
        %s266 = ssub.s32 %s37, 1
        %s267 = sand.u32 %s52, 1
        %s268 = sand.u32 %s52, 1
        %s269 = smul.addr %s268, 32
        %s270 = scalar_lea.vmem [#allocation7], %s269
        // Predicated region
        $region56: #{discriminator_loss_forward.2} parent=54 // pred_check
          %p271 = pneg %p65
        $region57: #{discriminator_loss_forward.2} parent=54 // pred_check_branch
          %273 = sbr.rel (%p271) target = $region59
        $region58: #{discriminator_loss_forward.2} parent=54 // pred_region
          _
        $region59: #{discriminator_loss_forward.2} parent=54 // pred_fallthru
          _
        %s274 = sand.u32 %s52, 1
        %s275 = sand.u32 %s52, 1
        %s276 = smul.addr %s275, 32
        %s277 = scalar_lea.vmem [#allocation7], %s276
        %p278 = pneg %p65
        %p279 = pneg %p62
        %s280 = sld [smem:[#allocation3 + %s42]]
        %p281 = scmp.lt.s32.totalorder %s280, 3
        %s282 = scalar_select %p281, %s280, 3
        %s283 = smul.addr %s282, 2
        %s284 = smul.addr %s283, 4
        %s285 = scalar_lea.vmem %s5, %s284
        %p286 = pneg %p93
        %p287 = pneg %p90
        %s288 = sld [smem:[#allocation3 + %s42]]
        %p289 = scmp.lt.s32.totalorder %s288, 3
        %s290 = scalar_select %p289, %s288, 3
        %s291 = smul.addr %s290, 2
        %s292 = smul.addr %s291, 8
        %s293 = scalar_lea.vmem %s6, %s292
        %p294 = pneg %p121
        %p295 = pneg %p118
        %s296 = sld [smem:[#allocation3 + %s42]]
        %p297 = scmp.lt.s32.totalorder %s296, 3
        %s298 = scalar_select %p297, %s296, 3
        %s299 = smul.addr %s298, 2
        %s300 = smul.addr %s299, 8
        %s301 = scalar_lea.vmem %s7, %s300
        %p302 = pneg %p149
        %p303 = pneg %p146
        %p304 = pneg %p177
        %p305 = pneg %p174
        %s306 = sld [smem:[#allocation4 + %s42]]
        %s307 = smul.u32 2, %s306
        %p308 = scmp.lt.s32.totalorder %s307, 7
        %s309 = scalar_select %p308, %s307, 7
        %s310 = smul.addr %s309, 4
        %s311 = scalar_lea.vmem %s8, %s310
        %s312 = sld [smem:[#allocation4 + %s42]]
        %s313 = smul.u32 4, %s312
        %s314 = sld [smem:[#allocation3 + %s42]]
        %p315 = scmp.lt.s32.totalorder %s314, 3
        %s316 = scalar_select %p315, %s314, 3
        %s317 = smul.addr %s316, 2
        %s318 = smul.addr %s317, 4
        %s319 = scalar_lea.vmem %s5, %s318
        %s320 = sld [smem:[#allocation3 + %s42]]
        %s321 = sld [smem:[#allocation3 + %s42]]
        %p322 = scmp.lt.s32.totalorder %s321, 3
        %s323 = scalar_select %p322, %s321, 3
        %s324 = smul.addr %s323, 2
        %s325 = smul.addr %s324, 8
        %s326 = scalar_lea.vmem %s6, %s325
        %s327 = sld [smem:[#allocation3 + %s42]]
        %s328 = sld [smem:[#allocation3 + %s42]]
        %p329 = scmp.lt.s32.totalorder %s328, 3
        %s330 = scalar_select %p329, %s328, 3
        %s331 = smul.addr %s330, 2
        %s332 = smul.addr %s331, 8
        %s333 = scalar_lea.vmem %s7, %s332
        %s334 = sld [smem:[#allocation3 + %s42]]
        %s335 = sld [smem:[#allocation4 + %s42]]
        %s336 = smul.u32 2, %s335
        %p337 = scmp.lt.s32.totalorder %s336, 7
        %s338 = scalar_select %p337, %s336, 7
        %s339 = smul.addr %s338, 4
        %s340 = scalar_lea.vmem %s8, %s339
        %s341 = sld [smem:[#allocation4 + %s42]]
        %s342 = smul.u32 2, %s341
        %v344 = vld [vmem:[%s319] sm:$0xf]
        %v345 = vld [vmem:[%s319 + $0x4] sm:$0xf]
        %v346 = vld [vmem:[%s270] sm:$0xff]
        %v347 = vld [vmem:[%s270 + $0x8] sm:$0xff]
        %v348 = vld [vmem:[%s270 + $0x10] sm:$0xff]
        %v349 = vld [vmem:[%s270 + $0x18] sm:$0xff]
        %v350 = vld [vmem:[%s326] sm:$0xff]
        %v351 = vld [vmem:[%s326 + $0x8] sm:$0xff]
        %353 = vset.pattern.permute.xlu0 0
        %354 = vperm.xlu0 %353, %v350
        %v355 = vpop.permute.xlu0 %354
        %358 = vset.pattern.permute.xlu0 0
        %359 = vperm.xlu0 %358, %v351
        %v360 = vpop.permute.xlu0 %359
        %v364 = vunpack.c.l.b16 %v344
        %v365 = vunpack.c.l.b16 %v345
        %v366 = vpack.c.b16 %v365, %v364
        %v371 = vunpack.c.l.b16 %v346
        %v372 = vunpack.c.h.b16 %v346
        %v373 = vunpack.c.l.b16 %v347
        %v374 = vunpack.c.h.b16 %v347
        %v375 = vunpack.c.l.b16 %v348
        %v376 = vunpack.c.h.b16 %v348
        %v377 = vunpack.c.l.b16 %v349
        %v378 = vunpack.c.h.b16 %v349
        %v379 = vpack.c.b16 %v375, %v371
        %v380 = vpack.c.b16 %v376, %v372
        %v381 = vpack.c.b16 %v377, %v373
        %v382 = vpack.c.b16 %v378, %v374
        %vm387 = vcmask 130048
        %v389 = vsel %vm387, %v366, 0
        %391 = vmatpush.bf16.msra.mxu0 0
        %392 = vmatpush.bf16.msra.mxu0 0
        %393 = vmatpush.bf16.msra.mxu0 0
        %394 = vmatpush.bf16.msra.mxu0 0
        %395 = vmatpush.bf16.msra.mxu0 0
        %396 = vmatpush.bf16.msra.mxu0 0
        %397 = vmatpush.bf16.msra.mxu0 0
        %398 = vmatpush.bf16.msra.mxu0 %v379
        %399 = vmatmul.bf16.gmra.mxu0 %v389
        %v400 = vpop.f32.mrf.mxu0
        %v401 = vadd.f32 %v355, %v400
        %v402 = vpop.f32.mrf.mxu0
        %v403 = vadd.f32 %v360, %v402
        %404 = vdwg.mxu0
        %405 = vmatpush.bf16.msra.mxu0 0
        %406 = vmatpush.bf16.msra.mxu0 0
        %407 = vmatpush.bf16.msra.mxu0 0
        %408 = vmatpush.bf16.msra.mxu0 0
        %409 = vmatpush.bf16.msra.mxu0 0
        %410 = vmatpush.bf16.msra.mxu0 0
        %411 = vmatpush.bf16.msra.mxu0 0
        %412 = vmatpush.bf16.msra.mxu0 %v380
        %413 = vmatmul.bf16.gmra.mxu0 %v389
        %v414 = vpop.f32.mrf.mxu0
        %v415 = vadd.f32 %v355, %v414
        %v416 = vpop.f32.mrf.mxu0
        %v417 = vadd.f32 %v360, %v416
        %418 = vdwg.mxu0
        %419 = vmatpush.bf16.msra.mxu0 0
        %420 = vmatpush.bf16.msra.mxu0 0
        %421 = vmatpush.bf16.msra.mxu0 0
        %422 = vmatpush.bf16.msra.mxu0 0
        %423 = vmatpush.bf16.msra.mxu0 0
        %424 = vmatpush.bf16.msra.mxu0 0
        %425 = vmatpush.bf16.msra.mxu0 0
        %426 = vmatpush.bf16.msra.mxu0 %v381
        %427 = vmatmul.bf16.gmra.mxu0 %v389
        %v428 = vpop.f32.mrf.mxu0
        %v429 = vadd.f32 %v355, %v428
        %v430 = vpop.f32.mrf.mxu0
        %v431 = vadd.f32 %v360, %v430
        %432 = vdwg.mxu0
        %433 = vmatpush.bf16.msra.mxu0 0
        %434 = vmatpush.bf16.msra.mxu0 0
        %435 = vmatpush.bf16.msra.mxu0 0
        %436 = vmatpush.bf16.msra.mxu0 0
        %437 = vmatpush.bf16.msra.mxu0 0
        %438 = vmatpush.bf16.msra.mxu0 0
        %439 = vmatpush.bf16.msra.mxu0 0
        %440 = vmatpush.bf16.msra.mxu0 %v382
        %441 = vmatmul.bf16.gmra.mxu0 %v389
        %v442 = vpop.f32.mrf.mxu0
        %v443 = vadd.f32 %v355, %v442
        %v444 = vpop.f32.mrf.mxu0
        %v445 = vadd.f32 %v360, %v444
        %446 = vdwg.mxu0
        %vm447 = vcmp.ge.f32.partialorder %v401, 0.0
        %vm448 = vcmp.ge.f32.partialorder %v415, 0.0
        %vm449 = vcmp.ge.f32.partialorder %v429, 0.0
        %vm450 = vcmp.ge.f32.partialorder %v443, 0.0
        %vm451 = vcmp.ge.f32.partialorder %v403, 0.0
        %vm452 = vcmp.ge.f32.partialorder %v417, 0.0
        %vm453 = vcmp.ge.f32.partialorder %v431, 0.0
        %vm454 = vcmp.ge.f32.partialorder %v445, 0.0
        %v455 = vmul.f32 %v401, 0.1
        %v456 = vmul.f32 %v415, 0.1
        %v457 = vmul.f32 %v429, 0.1
        %v458 = vmul.f32 %v443, 0.1
        %v459 = vmul.f32 %v403, 0.1
        %v460 = vmul.f32 %v417, 0.1
        %v461 = vmul.f32 %v431, 0.1
        %v462 = vmul.f32 %v445, 0.1
        %v463 = vsel %vm447, %v401, %v455
        %v464 = vsel %vm448, %v415, %v456
        %v465 = vsel %vm449, %v429, %v457
        %v466 = vsel %vm450, %v443, %v458
        %v467 = vsel %vm451, %v403, %v459
        %v468 = vsel %vm452, %v417, %v460
        %v469 = vsel %vm453, %v431, %v461
        %v470 = vsel %vm454, %v445, %v462
        %v471 = vld [vmem:[%s333] sm:$0xff]
        %v472 = vld [vmem:[%s333 + $0x8] sm:$0xff]
        %474 = vset.pattern.permute.xlu0 0
        %475 = vperm.xlu0 %474, %v471
        %v476 = vpop.permute.xlu0 %475
        %479 = vset.pattern.permute.xlu0 0
        %480 = vperm.xlu0 %479, %v472
        %v481 = vpop.permute.xlu0 %480
        %v483 = vmul.f32 %v463, %v476
        %v484 = vmul.f32 %v464, %v476
        %v485 = vmul.f32 %v465, %v476
        %v486 = vmul.f32 %v466, %v476
        %v487 = vmul.f32 %v467, %v481
        %v488 = vmul.f32 %v468, %v481
        %v489 = vmul.f32 %v469, %v481
        %v490 = vmul.f32 %v470, %v481
        %v491 = vadd.f32 %v483, %v487
        %v492 = vrot.slane %v491, 4
        %v493 = vadd.f32 %v491, %v492
        %v494 = vrot.slane %v493, 2
        %v495 = vadd.f32 %v493, %v494
        %v496 = vrot.slane %v495, 1
        %v497 = vadd.f32 %v495, %v496
        %v498 = vadd.f32 %v484, %v488
        %v499 = vrot.slane %v498, 4
        %v500 = vadd.f32 %v498, %v499
        %v501 = vrot.slane %v500, 2
        %v502 = vadd.f32 %v500, %v501
        %v503 = vrot.slane %v502, 1
        %v504 = vadd.f32 %v502, %v503
        %v505 = vadd.f32 %v485, %v489
        %v506 = vrot.slane %v505, 4
        %v507 = vadd.f32 %v505, %v506
        %v508 = vrot.slane %v507, 2
        %v509 = vadd.f32 %v507, %v508
        %v510 = vrot.slane %v509, 1
        %v511 = vadd.f32 %v509, %v510
        %v512 = vadd.f32 %v486, %v490
        %v513 = vrot.slane %v512, 4
        %v514 = vadd.f32 %v512, %v513
        %v515 = vrot.slane %v514, 2
        %v516 = vadd.f32 %v514, %v515
        %v517 = vrot.slane %v516, 1
        %v518 = vadd.f32 %v516, %v517
        %s519 = sld [smem:[#allocation3 + %s42]]
        %s520 = sld [smem:[#allocation6 + %s519]]
        %v521 = vstv %s520
        %v522 = vadd.f32 %v497, %v521
        %v523 = vadd.f32 %v504, %v521
        %v524 = vadd.f32 %v511, %v521
        %v525 = vadd.f32 %v518, %v521
        %v526 = vlaneseq
        %v527 = vand.u32 %v526, 127
        %v528 = vadd.s32 %v527, 128
        %s529 = sld [smem:[#allocation5 + %s42]]
        %v530 = vstv %s529
        %vm531 = vcmp.lt.s32.totalorder %v527, %v530
        %vm532 = vcmp.lt.s32.totalorder %v528, %v530
        %v533 = vsel %vm531, 1, 0
        %v534 = vsel %vm532, 1, 0
        %v535 = vcvt.s32.f32 %v533
        %v536 = vcvt.s32.f32 %v534
        %v537 = vsub.f32 %v522, %v524
        %v538 = vsub.f32 %v523, %v525
        %v539 = vsub.f32 %v522, 1.0
        %v540 = vsub.f32 %v523, 1.0
        %v541 = vmul.f32 %v535, %v539
        %v542 = vmul.f32 %v536, %v540
        %v543 = vmul.f32 %v541, %v539
        %v544 = vmul.f32 %v542, %v540
        %v545 = vmul.f32 %v535, %v524
        %v546 = vmul.f32 %v536, %v525
        %v547 = vmul.f32 %v545, %v524
        %v548 = vmul.f32 %v546, %v525
        %vm549 = vcmask 1040384
        %v550 = vsel %vm549, %v537, %v543
        %v551 = vsel %vm549, %v538, %v544
        %vm552 = vcmask 1041408
        %v553 = vsel %vm552, %v550, %v547
        %v554 = vsel %vm552, %v551, %v548
        %v557 = vrot.slane %v554, 4
        %vm558 = vcmask 1043456
        %v559 = vsel %vm558, %v553, %v557
        %561 = vst [vmem:[%s340] sm:$0x77] %v559
        %s562 = sld [smem:[#allocation4 + %s42]]
        %s563 = smul.u32 2, %s562
        %p564 = scmp.lt.s32.totalorder %s563, 7
        %s565 = scalar_select %p564, %s563, 7
        %s566 = smul.addr %s565, 4
        %s567 = scalar_lea.vmem %s8, %s566
        // Predicated region
        $region60: #{discriminator_loss_forward.2} parent=54 // pred_check
          %p568 = pneg %p174
        $region61: #{discriminator_loss_forward.2} parent=54 // pred_check_branch
          %570 = sbr.rel (%p568) target = $region63
        $region62: #{discriminator_loss_forward.2} parent=54 // pred_region
          %s571 = sld [smem:[#allocation4 + %s42]]
          %s572 = smul.u32 2, %s571
        $region63: #{discriminator_loss_forward.2} parent=54 // pred_fallthru
          _
      $region55: #{discriminator_loss_forward.2} parent=5 // pred_fallthru
        _
      %p573 = scmp.le.s32.totalorder 2, %s37
      // Predicated region
      $region64: #{discriminator_loss_forward.2} parent=5 // pred_check
        %p574 = pneg %p573
      $region65: #{discriminator_loss_forward.2} parent=5 // pred_check_branch
        %576 = sbr.rel (%p574) target = $region67
      $region66: #{discriminator_loss_forward.2} parent=5 // pred_region
        %s577 = ssub.s32 %s37, 2
        // Predicated region
        $region68: #{discriminator_loss_forward.2} parent=66 // pred_check
          %p578 = pneg %p180
        $region69: #{discriminator_loss_forward.2} parent=66 // pred_check_branch
          %580 = sbr.rel (%p578) target = $region71
        $region70: #{discriminator_loss_forward.2} parent=66 // pred_region
          %s581 = sld [smem:[#allocation4 + %s43]]
          %s582 = smul.u32 2, %s581
          %p583 = scmp.lt.s32.totalorder %s582, 7
          %s584 = scalar_select %p583, %s582, 7
          %s585 = smul.addr %s584, 4
          %s586 = scalar_lea.vmem %s8, %s585
        $region71: #{discriminator_loss_forward.2} parent=66 // pred_fallthru
          _
      $region67: #{discriminator_loss_forward.2} parent=5 // pred_fallthru
        _
    $region6: #{discriminator_loss_forward.2} parent=1 // loop_footer
      %s41 = sadd.s32 1, %s37
    $region7: #{discriminator_loss_forward.2} parent=1 // loop_footer_branch
      %36 = sbr.rel target = $region3
    $region8: #{discriminator_loss_forward.2} parent=1 // loop_exit
      _

</llo_original>
